<compile_context>
chip_gen: v5e
topology: v5e:2x2
jax: 0.10.0
libtpu: 0.0.40
codegen_flags: <defaults>
</compile_context>

<pallas_src>
import functools

import jax
import jax.numpy as jnp
from jax import lax
from jax.experimental import pallas as pl
from jax.experimental.pallas import tpu as pltpu

_EPS = 1e-6
_LANE = 128
_SUBLANE = 8
_TARGET_BLOCK_BYTES = 6 * 1024 * 1024   # per x-block budget (f32, conservative)
_MAX_TILE_ROWS = 1024
_VMEM_LIMIT_BYTES = 48 * 1024 * 1024    # explicit; headroom vs v7x 64 MiB physical
_MIN_PALLAS_ELEMENTS = 16 * 1024        # below this, pure-JAX / XLA fusion wins


def _round_up(x, m):
    return ((x + m - 1) // m) * m


def _pair_norm_ref(x, mode="PN-SCS", scale=1.0):
    """Pure-JAX reference mirroring the PyTorch forward (also the tiny-input path)."""
    if mode == "None":
        return x
    xf = x.astype(jnp.float32)
    col_mean = xf.mean(axis=0)
    if mode == "PN":
        xc = xf - col_mean
        rownorm_mean = jnp.sqrt(_EPS + (xc ** 2).sum(axis=1).mean())
        return scale * xc / rownorm_mean
    if mode == "PN-SI":
        xc = xf - col_mean
        rownorm = jnp.sqrt(_EPS + (xc ** 2).sum(axis=1, keepdims=True))
        return scale * xc / rownorm
    # PN-SCS: row norm of the ORIGINAL x, then center.
    rownorm = jnp.sqrt(_EPS + (xf ** 2).sum(axis=1, keepdims=True))
    return scale * xf / rownorm - col_mean


# ---------------------------------------------------------------------------
# Pass 1: global column statistics (sum and sum-of-squares over rows).
# ---------------------------------------------------------------------------
def _stats_kernel(x_ref, colsum_ref, colsumsq_ref):
    i = pl.program_id(0)

    @pl.when(i == 0)
    def _():
        colsum_ref[...] = jnp.zeros_like(colsum_ref)
        colsumsq_ref[...] = jnp.zeros_like(colsumsq_ref)

    x = x_ref[...].astype(jnp.float32)
    # Cross-sublane (axis-0) reduction on the MXU: ones @ x.  An 8-row ones LHS
    # keeps every matmul dim tile-aligned; all result rows are identical.
    ones = jnp.ones((_SUBLANE, x.shape[0]), jnp.float32)
    cs = jnp.dot(ones, x, preferred_element_type=jnp.float32)[0:1, :]
    csq = jnp.dot(ones, x * x, preferred_element_type=jnp.float32)[0:1, :]
    colsum_ref[...] += cs
    colsumsq_ref[...] += csq


# ---------------------------------------------------------------------------
# Pass 2: apply normalization (elementwise, row-tiled, embarrassingly parallel).
# ---------------------------------------------------------------------------
def _apply_kernel(x_ref, colsum_ref, colsumsq_ref, o_ref, *, mode, scale, n_rows):
    x = x_ref[...].astype(jnp.float32)
    inv_n = jnp.float32(1.0 / n_rows)                 # TRUE row count, not padded
    col_mean = colsum_ref[...] * inv_n                # (1, Dp)

    if mode == "PN-SCS":
        rowsumsq = jnp.sum(x * x, axis=1, keepdims=True)        # (Tn, 1)
        inv_rn = lax.rsqrt(rowsumsq + _EPS)                      # EUP rsqrt
        out = (scale * x) * inv_rn - col_mean
    elif mode == "PN-SI":
        xc = x - col_mean
        rowsumsq = jnp.sum(xc * xc, axis=1, keepdims=True)
        inv_rn = lax.rsqrt(rowsumsq + _EPS)
        out = (scale * xc) * inv_rn
    else:  # "PN"
        xc = x - col_mean
        # mean_i sum_j (x_ij - m_j)^2 == sum(x^2)/N - sum(m^2)   (global scalar)
        total_sumsq = jnp.sum(colsumsq_ref[...])
        mean_rowsumsq = total_sumsq * inv_n - jnp.sum(col_mean * col_mean)
        inv_rn = lax.rsqrt(mean_rowsumsq + _EPS)
        out = xc * (scale * inv_rn)

    o_ref[...] = out.astype(o_ref.dtype)


def pair_norm(x, mode="PN-SCS", scale=1.0, tile_rows=None):
    """PairNorm forward.  x: [num_nodes N, feature_dim D]."""
    assert mode in ["None", "PN", "PN-SI", "PN-SCS"]
    if mode == "None":
        return x
    N, D = x.shape
    scale = float(scale)

    if N * D < _MIN_PALLAS_ELEMENTS:
        # Tiny graphs: kernel launch + DMA setup dwarfs the ~µs of work.
        return _pair_norm_ref(x, mode=mode, scale=scale).astype(x.dtype)

    # ---- padded / tiled geometry --------------------------------------------
    d_pad = _round_up(D, _LANE)                        # lane-dense, unmasked stores
    bytes_per_row = d_pad * 4
    auto_rows = max(_SUBLANE,
                    (_TARGET_BLOCK_BYTES // bytes_per_row) // _SUBLANE * _SUBLANE)
    tile_n = min(auto_rows, _MAX_TILE_ROWS)
    tile_n = min(tile_n, _round_up(N, _SUBLANE))       # don't over-tile small N
    if tile_rows is not None:                          # explicit override (tuning/tests)
        tile_n = max(_SUBLANE, _round_up(int(tile_rows), _SUBLANE))
    n_pad = _round_up(N, tile_n)

    needs_pad = (n_pad != N) or (d_pad != D)
    x_p = jnp.pad(x, ((0, n_pad - N), (0, d_pad - D))) if needs_pad else x
    # TODO(synk): for unaligned shapes the jnp.pad copy adds one extra read/write of x;
    # could be folded into the kernels with masked edge tiles if that ever matters.

    grid = (n_pad // tile_n,)
    stats_params = pltpu.CompilerParams(
        dimension_semantics=("arbitrary",), vmem_limit_bytes=_VMEM_LIMIT_BYTES)
    apply_params = pltpu.CompilerParams(
        dimension_semantics=("parallel",), vmem_limit_bytes=_VMEM_LIMIT_BYTES)

    # ---- pass 1: column statistics ------------------------------------------
    col_sum, col_sumsq = pl.pallas_call(
        _stats_kernel,
        out_shape=(jax.ShapeDtypeStruct((1, d_pad), jnp.float32),
                   jax.ShapeDtypeStruct((1, d_pad), jnp.float32)),
        grid=grid,
        in_specs=[pl.BlockSpec((tile_n, d_pad), lambda i: (i, 0))],
        out_specs=(pl.BlockSpec((1, d_pad), lambda i: (0, 0)),
                   pl.BlockSpec((1, d_pad), lambda i: (0, 0))),
        compiler_params=stats_params,
    )(x_p)

    # ---- pass 2: apply --------------------------------------------------------
    apply_kernel = functools.partial(_apply_kernel, mode=mode, scale=scale, n_rows=N)
    out_p = pl.pallas_call(
        apply_kernel,
        out_shape=jax.ShapeDtypeStruct((n_pad, d_pad), x.dtype),
        grid=grid,
        in_specs=[pl.BlockSpec((tile_n, d_pad), lambda i: (i, 0)),
                  pl.BlockSpec((1, d_pad), lambda i: (0, 0)),
                  pl.BlockSpec((1, d_pad), lambda i: (0, 0))],
        out_specs=pl.BlockSpec((tile_n, d_pad), lambda i: (i, 0)),
        compiler_params=apply_params,
        # Reuse the padded temp's HBM buffer for the output when we created one.
        input_output_aliases=({0: 0} if needs_pad else {}),
    )(x_p, col_sum, col_sumsq)

    if needs_pad:
        out_p = out_p[:N, :D]
    return out_p


if __name__ == "__main__":
    key = jax.random.PRNGKey(0)
    ok = True

    # (1) aligned shape, auto tiling (1024-row tiles -> 2-step grid, accumulator path)
    x_a = jax.random.normal(jax.random.fold_in(key, 0), (2048, 256), jnp.float32)
    # (2) unaligned shape + small forced tile: exercises row/column zero-padding
    #     and multi-tile column-sum accumulation.
    x_b = jax.random.normal(jax.random.fold_in(key, 1), (1000, 200), jnp.float32)

    for x, trows in ((x_a, None), (x_b, 256)):
        for m in ("None", "PN", "PN-SI", "PN-SCS"):
            out = jax.block_until_ready(pair_norm(x, mode=m, scale=1.0, tile_rows=trows))
            ref = _pair_norm_ref(x, mode=m, scale=1.0)
            if out.shape != x.shape or not bool(
                    jnp.allclose(out.astype(jnp.float32), ref.astype(jnp.float32),
                                 atol=1e-4, rtol=1e-4)):
                ok = False

    # (3) tiny input takes the pure-JAX fast path (kernel overhead not worth it)
    x_s = jax.random.normal(jax.random.fold_in(key, 2), (32, 64), jnp.float32)
    out_s = jax.block_until_ready(pair_norm(x_s))
    ok = ok and bool(jnp.allclose(out_s, _pair_norm_ref(x_s), atol=1e-4, rtol=1e-4))

    if ok:
        print("KERNEL_OK")
</pallas_src>

<mosaic_0001>
module attributes {stable_mosaic.version = 11 : i64} {
  func.func @_stats_kernel(%arg0: i32, %arg1: memref<1024x256xf32, #tpu.memory_space<vmem>>, %arg2: memref<1x256xf32, #tpu.memory_space<vmem>>, %arg3: memref<1x256xf32, #tpu.memory_space<vmem>>) attributes {dimension_semantics = [#tpu.dimension_semantics<arbitrary>], iteration_bounds = array<i64: 2>, scalar_prefetch = 0 : i64, scratch_operands = 0 : i64, tpu.core_type = #tpu.core_type<tc>, window_params = [{transform_indices = @transform_0, window_bounds = array<i64: 1024, 256>}, {pipeline_mode = #tpu.pipeline_mode<synchronous>, transform_indices = @transform_1, window_bounds = array<i64: 1, 256>}, {pipeline_mode = #tpu.pipeline_mode<synchronous>, transform_indices = @transform_2, window_bounds = array<i64: 1, 256>}]} {
    %c0_i32 = arith.constant 0 : i32
    %0 = arith.cmpi eq, %arg0, %c0_i32 : i32
    %1 = arith.extui %0 : i1 to i32
    %c0_i32_0 = arith.constant 0 : i32
    %2 = arith.cmpi ne, %1, %c0_i32_0 : i32
    scf.if %2 {
      %cst_12 = arith.constant 0.000000e+00 : f32
      %16 = vector.broadcast %cst_12 : f32 to vector<1x256xf32>
      %c0_13 = arith.constant 0 : index
      %c0_14 = arith.constant 0 : index
      %17 = vector.load %arg2[%c0_13, %c0_14] : memref<1x256xf32, #tpu.memory_space<vmem>>, vector<1x256xf32>
      tpu.vector_store %arg2[%c0_13, %c0_14], %16 {strides = array<i32>} : memref<1x256xf32, #tpu.memory_space<vmem>>, vector<1x256xf32>,
      %cst_15 = arith.constant 0.000000e+00 : f32
      %18 = vector.broadcast %cst_15 : f32 to vector<1x256xf32>
      %c0_16 = arith.constant 0 : index
      %c0_17 = arith.constant 0 : index
      %19 = vector.load %arg3[%c0_16, %c0_17] : memref<1x256xf32, #tpu.memory_space<vmem>>, vector<1x256xf32>
      tpu.vector_store %arg3[%c0_16, %c0_17], %18 {strides = array<i32>} : memref<1x256xf32, #tpu.memory_space<vmem>>, vector<1x256xf32>,
    } else {
    }
    %c0 = arith.constant 0 : index
    %c0_1 = arith.constant 0 : index
    %3 = vector.load %arg1[%c0, %c0_1] : memref<1024x256xf32, #tpu.memory_space<vmem>>, vector<1024x256xf32>
    %cst = arith.constant 1.000000e+00 : f32
    %4 = vector.broadcast %cst : f32 to vector<8x1024xf32>
    %cst_2 = arith.constant dense<0.000000e+00> : vector<8x256xf32>
    %5 = tpu.matmul %4, %3, %cst_2 {dimension_numbers = #tpu.dot_dimension_numbers<[1], [0], [0], [1], [0, 0, 1, 1], [], []>} : vector<8x1024xf32>, vector<1024x256xf32>, vector<8x256xf32> -> vector<8x256xf32>
    %6 = vector.extract_strided_slice %5 {offsets = [0, 0], sizes = [1, 256], strides = [1, 1]} : vector<8x256xf32> to vector<1x256xf32>
    %7 = arith.mulf %3, %3 : vector<1024x256xf32>
    %cst_3 = arith.constant dense<0.000000e+00> : vector<8x256xf32>
    %8 = tpu.matmul %4, %7, %cst_3 {dimension_numbers = #tpu.dot_dimension_numbers<[1], [0], [0], [1], [0, 0, 1, 1], [], []>} : vector<8x1024xf32>, vector<1024x256xf32>, vector<8x256xf32> -> vector<8x256xf32>
    %9 = vector.extract_strided_slice %8 {offsets = [0, 0], sizes = [1, 256], strides = [1, 1]} : vector<8x256xf32> to vector<1x256xf32>
    %c0_4 = arith.constant 0 : index
    %c0_5 = arith.constant 0 : index
    %10 = vector.load %arg2[%c0_4, %c0_5] : memref<1x256xf32, #tpu.memory_space<vmem>>, vector<1x256xf32>
    %11 = arith.addf %10, %6 : vector<1x256xf32>
    %c0_6 = arith.constant 0 : index
    %c0_7 = arith.constant 0 : index
    %12 = vector.load %arg2[%c0_6, %c0_7] : memref<1x256xf32, #tpu.memory_space<vmem>>, vector<1x256xf32>
    tpu.vector_store %arg2[%c0_6, %c0_7], %11 {strides = array<i32>} : memref<1x256xf32, #tpu.memory_space<vmem>>, vector<1x256xf32>,
    %c0_8 = arith.constant 0 : index
    %c0_9 = arith.constant 0 : index
    %13 = vector.load %arg3[%c0_8, %c0_9] : memref<1x256xf32, #tpu.memory_space<vmem>>, vector<1x256xf32>
    %14 = arith.addf %13, %9 : vector<1x256xf32>
    %c0_10 = arith.constant 0 : index
    %c0_11 = arith.constant 0 : index
    %15 = vector.load %arg3[%c0_10, %c0_11] : memref<1x256xf32, #tpu.memory_space<vmem>>, vector<1x256xf32>
    tpu.vector_store %arg3[%c0_10, %c0_11], %14 {strides = array<i32>} : memref<1x256xf32, #tpu.memory_space<vmem>>, vector<1x256xf32>,
    return
  }
  func.func @transform_0(%arg0: i32) -> (i32, i32) {
    %c0_i32 = arith.constant 0 : i32
    %c0_i32_0 = arith.constant 0 : i32
    return %arg0, %c0_i32 : i32, i32
  }
  func.func @transform_1(%arg0: i32) -> (i32, i32) {
    %c0_i32 = arith.constant 0 : i32
    %c0_i32_0 = arith.constant 0 : i32
    %c0_i32_1 = arith.constant 0 : i32
    return %c0_i32, %c0_i32_0 : i32, i32
  }
  func.func @transform_2(%arg0: i32) -> (i32, i32) {
    %c0_i32 = arith.constant 0 : i32
    %c0_i32_0 = arith.constant 0 : i32
    %c0_i32_1 = arith.constant 0 : i32
    return %c0_i32, %c0_i32_0 : i32, i32
  }
}

</mosaic_0001>

<llo_original>
// kernel: tpu_custom_call.1
$region0: #{tpu_custom_call.1}
  #allocation0 [shape = 'u32[]', space=smem, size = 0x4, offset = 0x4, fixed_abs, tag = 'smem constant byte address 0x4 - core index']
  #allocation1 [shape = 'u32[72,128]{1,0:T(1,128)}', space=vmem, size = 0x9000, scoped, tag = 'internal scratch']
  %s0 = inlined_call_operand.hbm [shape: f32[2048,256], index: 0, kind: input, shape index: {}]
  %s1 = inlined_call_operand.hbm [shape: f32[1,256], index: 1, kind: output, shape index: {0}]
  %s2 = inlined_call_operand.hbm [shape: f32[1,256], index: 2, kind: output, shape index: {1}]
  %3 = xla_tuple %s1, %s2
  %s4 = sld [smem:[#allocation0]]
  $region53: #{tpu_custom_call.1} parent=0
    _
  %s6 = ssub.s32 1, %s4
  %s7 = scalar_select 0, %s6, %s4
  $region1: #{tpu_custom_call.1} parent=0
    #allocation2 [shape = 'u8[2097152]{0}', space=vmem, size = 0x200000, scoped, tag = 'input window, operand 0']
    #allocation3 [shape = 's32[2]{0}', space=sflag, size = 0x8, scoped, tag = 'scoped memory for tpu_custom_call.1']
    #allocation4 [shape = 's32[2]{0}', space=sflag, size = 0x8, scoped, tag = 'scoped memory for tpu_custom_call.1']
    #allocation5 [shape = 'u8[1024]{0}', space=vmem, size = 0x400, scoped, tag = 'output window, operand 0, single buffered']
    #allocation6 [shape = 'u8[1024]{0}', space=vmem, size = 0x400, scoped, tag = 'output window, operand 1, single buffered']
    #allocation7 [shape = 's32[1]{0}', space=sflag, size = 0x4, scoped, tag = 'scoped memory for tpu_custom_call.1']
    %8 = vsyncpa [#allocation3], 0
    %s9 = scalar_lea.sflag [#allocation3], 1
    %10 = vsyncpa %s9, 0
    %11 = vsyncpa [#allocation4], 0
    %12 = vsyncpa [#allocation7], 0
    loop: start=0, step=1, limit=4
    $region2: #{tpu_custom_call.1} parent=1 // loop_pre_header
      _
    $region3: #{tpu_custom_call.1} parent=1 // loop_header
      %s14 = sphi 0, %s18
      %p15 = scmp.ge.s32.totalorder %s14, 4
      %s24 = sphi 0, %s26
      %s27 = sphi 0, %s24
      %s28 = sphi 0, %s27
      %s44 = sphi 0, %s28
      %s48 = sphi 0, %s48
      %s50 = sphi 0, %s48
      %s51 = sphi 0, %s50
      %s65 = sphi 0, %s51
      %s69 = sphi 0, %s69
      %s71 = sphi 0, %s69
      %s72 = sphi 0, %s71
      %s86 = sphi 0, %s72
    $region4: #{tpu_custom_call.1} parent=1 // loop_header_branch
      %17 = sbr.rel (%p15) target = $region8
    $region5: #{tpu_custom_call.1} parent=1 // loop_body
      %s19 = ssub.s32 %s14, 1
      %s20 = ssub.s32 %s14, 2
      %s21 = sadd.s32 %s14, 1
      %s22 = ssub.s32 %s14, %s21
      %p23 = scmp.eq.s32.totalorder %s22, 0
      %s25 = sadd.s32 %s24, 1
      %s26 = scalar_select %p23, %s24, %s25
      %p29 = pneg %p23
      %p30 = scmp.eq.s32.totalorder %s14, 1
      %p31 = por %p29, %p30
      %p32 = scmp.ne.s32.totalorder %s24, %s27
      %p33 = scmp.eq.s32.totalorder %s14, 0
      %p34 = por %p32, %p33
      %p35 = scmp.ne.s32.totalorder %s24, %s27
      %p36 = scmp.eq.s32.totalorder %s19, 1
      %p37 = por %p35, %p36
      %p38 = scmp.ne.s32.totalorder %s27, %s28
      %p39 = scmp.eq.s32.totalorder %s19, 0
      %p40 = por %p38, %p39
      %p41 = scmp.ne.s32.totalorder %s27, %s28
      %p42 = scmp.eq.s32.totalorder %s20, 1
      %p43 = por %p41, %p42
      %p45 = scmp.ne.s32.totalorder %s28, %s44
      %p46 = scmp.eq.s32.totalorder %s20, 0
      %p47 = por %p45, %p46
      %s49 = sadd.s32 %s48, 1
      %p52 = scmp.eq.s32.totalorder %s14, 1
      %p53 = scmp.ne.s32.totalorder %s48, %s50
      %p54 = scmp.eq.s32.totalorder %s14, 0
      %p55 = por %p53, %p54
      %p56 = scmp.ne.s32.totalorder %s48, %s50
      %p57 = scmp.eq.s32.totalorder %s19, 1
      %p58 = por %p56, %p57
      %p59 = scmp.ne.s32.totalorder %s50, %s51
      %p60 = scmp.eq.s32.totalorder %s19, 0
      %p61 = por %p59, %p60
      %p62 = scmp.ne.s32.totalorder %s50, %s51
      %p63 = scmp.eq.s32.totalorder %s20, 1
      %p64 = por %p62, %p63
      %p66 = scmp.ne.s32.totalorder %s51, %s65
      %p67 = scmp.eq.s32.totalorder %s20, 0
      %p68 = por %p66, %p67
      %s70 = sadd.s32 %s69, 1
      %p73 = scmp.eq.s32.totalorder %s14, 1
      %p74 = scmp.ne.s32.totalorder %s69, %s71
      %p75 = scmp.eq.s32.totalorder %s14, 0
      %p76 = por %p74, %p75
      %p77 = scmp.ne.s32.totalorder %s69, %s71
      %p78 = scmp.eq.s32.totalorder %s19, 1
      %p79 = por %p77, %p78
      %p80 = scmp.ne.s32.totalorder %s71, %s72
      %p81 = scmp.eq.s32.totalorder %s19, 0
      %p82 = por %p80, %p81
      %p83 = scmp.ne.s32.totalorder %s71, %s72
      %p84 = scmp.eq.s32.totalorder %s20, 1
      %p85 = por %p83, %p84
      %p87 = scmp.ne.s32.totalorder %s72, %s86
      %p88 = scmp.eq.s32.totalorder %s20, 0
      %p89 = por %p87, %p88
      %p90 = scmp.le.s32.totalorder 1, %s14
      %p91 = scmp.lt.s32.totalorder %s14, 3
      %p92 = pnand %p90, %p91
      %p93 = pneg %p92
      // Predicated region
      $region9: #{tpu_custom_call.1} parent=5 // pred_check
        _
      $region10: #{tpu_custom_call.1} parent=5 // pred_check_branch
        %95 = sbr.rel (%p92) target = $region12
      $region11: #{tpu_custom_call.1} parent=5 // pred_region
        %s96 = ssub.s32 %s14, 1
      $region12: #{tpu_custom_call.1} parent=5 // pred_fallthru
        _
      %p97 = scmp.lt.s32.totalorder %s14, 2
      // Predicated region
      $region13: #{tpu_custom_call.1} parent=5 // pred_check
        %p98 = pneg %p97
      $region14: #{tpu_custom_call.1} parent=5 // pred_check_branch
        %100 = sbr.rel (%p98) target = $region16
      $region15: #{tpu_custom_call.1} parent=5 // pred_region
        // Predicated region
        $region17: #{tpu_custom_call.1} parent=15 // pred_check
          %p101 = pneg %p34
        $region18: #{tpu_custom_call.1} parent=15 // pred_check_branch
          %103 = sbr.rel (%p101) target = $region20
        $region19: #{tpu_custom_call.1} parent=15 // pred_region
          %s104 = sand.u32 %s24, 1
          %s105 = scalar_lea.sflag [#allocation3], %s104
          %s106 = sand.u32 %s24, 1
          %s107 = smul.addr %s106, 2048
          %s108 = scalar_lea.vmem [#allocation2], %s107
          %s109 = smul.u32 128, %s14
          %111 = vsyncadd %s105, 0
          %s112 = smul.addr %s109, 2
          %s113 = smul.addr %s112, 8
          %s114 = scalar_lea.hbm %s0, %s113
          %s115 = sshll.u32 %s114, 4
          %s116 = int_to_ptr.hbm [resolvable:$true] %s115
          %s117 = sshll.u32 %s108, 4
          %s118 = int_to_ptr.vmem [resolvable:$true] %s117
          %123 = dma.hbm_to_vmem [thread:$0]  %s116, 32768, %s118, %s105, 256, 256, 16
        $region20: #{tpu_custom_call.1} parent=15 // pred_fallthru
          _
      $region16: #{tpu_custom_call.1} parent=5 // pred_fallthru
        _
      %p124 = scmp.le.s32.totalorder 1, %s14
      %p125 = scmp.lt.s32.totalorder %s14, 3
      %p126 = pnand %p124, %p125
      %p127 = pneg %p126
      // Predicated region
      $region21: #{tpu_custom_call.1} parent=5 // pred_check
        _
      $region22: #{tpu_custom_call.1} parent=5 // pred_check_branch
        %129 = sbr.rel (%p126) target = $region24
      $region23: #{tpu_custom_call.1} parent=5 // pred_region
        %s130 = ssub.s32 %s14, 1
        %s131 = sand.u32 %s27, 1
        %s132 = scalar_lea.sflag [#allocation3], %s131
        %s133 = sand.u32 %s27, 1
        %s134 = smul.addr %s133, 2048
        %s135 = scalar_lea.vmem [#allocation2], %s134
        // Predicated region
        $region25: #{tpu_custom_call.1} parent=23 // pred_check
          %p136 = pneg %p40
        $region26: #{tpu_custom_call.1} parent=23 // pred_check_branch
          %138 = sbr.rel (%p136) target = $region28
        $region27: #{tpu_custom_call.1} parent=23 // pred_region
          %140 = dma.done %s132, 32768
        $region28: #{tpu_custom_call.1} parent=23 // pred_fallthru
          _
        %s141 = sand.u32 %s27, 1
        %s142 = scalar_lea.sflag [#allocation3], %s141
        %s143 = sand.u32 %s27, 1
        %s144 = smul.addr %s143, 2048
        %s145 = scalar_lea.vmem [#allocation2], %s144
        %p146 = pneg %p40
        %p147 = pneg %p37
        %p148 = pneg %p61
        %p149 = pneg %p58
        %p150 = pneg %p82
        %p151 = pneg %p79
        %s152 = smul.u32 128, %s19
        %p153 = scmp.eq.s32.totalorder %s19, 0
        // Predicated region
        $region29: #{tpu_custom_call.1} parent=23 // pred_check
          %p154 = pneg %p153
        $region30: #{tpu_custom_call.1} parent=23 // pred_check_branch
          %156 = sbr.rel (%p154) target = $region32
        $region31: #{tpu_custom_call.1} parent=23 // pred_region
          %v157 = vlaneseq
          %vm158 = vcmp.ge.s32.totalorder %v157, 0
          %vm159 = vcmp.lt.s32.totalorder %v157, 256
          %vm160 = vmand %vm158, %vm159
          %161 = vst.msk [vmem:[#allocation5] sm:$0x3] %vm160, 0.0
          %162 = vst.msk [vmem:[#allocation6] sm:$0x3] %vm160, 0.0
        $region32: #{tpu_custom_call.1} parent=23 // pred_fallthru
          _
        %v163 = vld [vmem:[%s135] sm:$0xff]
        %v164 = vld [vmem:[%s135 + $0x8] sm:$0xff]
        %v165 = vld [vmem:[%s135 + $0x10] sm:$0xff]
        %v166 = vld [vmem:[%s135 + $0x18] sm:$0xff]
        %v167 = vld [vmem:[%s135 + $0x20] sm:$0xff]
        %v168 = vld [vmem:[%s135 + $0x28] sm:$0xff]
        %v169 = vld [vmem:[%s135 + $0x30] sm:$0xff]
        %v170 = vld [vmem:[%s135 + $0x38] sm:$0xff]
        %v171 = vld [vmem:[%s135 + $0x40] sm:$0xff]
        %v172 = vld [vmem:[%s135 + $0x48] sm:$0xff]
        %v173 = vld [vmem:[%s135 + $0x50] sm:$0xff]
        %v174 = vld [vmem:[%s135 + $0x58] sm:$0xff]
        %v175 = vld [vmem:[%s135 + $0x60] sm:$0xff]
        %v176 = vld [vmem:[%s135 + $0x68] sm:$0xff]
        %v177 = vld [vmem:[%s135 + $0x70] sm:$0xff]
        %v178 = vld [vmem:[%s135 + $0x78] sm:$0xff]
        %v179 = vld [vmem:[%s135 + $0x80] sm:$0xff]
        %v180 = vld [vmem:[%s135 + $0x88] sm:$0xff]
        %v181 = vld [vmem:[%s135 + $0x90] sm:$0xff]
        %v182 = vld [vmem:[%s135 + $0x98] sm:$0xff]
        %v183 = vld [vmem:[%s135 + $0xa0] sm:$0xff]
        %v184 = vld [vmem:[%s135 + $0xa8] sm:$0xff]
        %v185 = vld [vmem:[%s135 + $0xb0] sm:$0xff]
        %v186 = vld [vmem:[%s135 + $0xb8] sm:$0xff]
        %v187 = vld [vmem:[%s135 + $0xc0] sm:$0xff]
        %v188 = vld [vmem:[%s135 + $0xc8] sm:$0xff]
        %v189 = vld [vmem:[%s135 + $0xd0] sm:$0xff]
        %v190 = vld [vmem:[%s135 + $0xd8] sm:$0xff]
        %v191 = vld [vmem:[%s135 + $0xe0] sm:$0xff]
        %v192 = vld [vmem:[%s135 + $0xe8] sm:$0xff]
        %v193 = vld [vmem:[%s135 + $0xf0] sm:$0xff]
        %v194 = vld [vmem:[%s135 + $0xf8] sm:$0xff]
        %v195 = vld [vmem:[%s135 + $0x100] sm:$0xff]
        %v196 = vld [vmem:[%s135 + $0x108] sm:$0xff]
        %v197 = vld [vmem:[%s135 + $0x110] sm:$0xff]
        %v198 = vld [vmem:[%s135 + $0x118] sm:$0xff]
        %v199 = vld [vmem:[%s135 + $0x120] sm:$0xff]
        %v200 = vld [vmem:[%s135 + $0x128] sm:$0xff]
        %v201 = vld [vmem:[%s135 + $0x130] sm:$0xff]
        %v202 = vld [vmem:[%s135 + $0x138] sm:$0xff]
        %v203 = vld [vmem:[%s135 + $0x140] sm:$0xff]
        %v204 = vld [vmem:[%s135 + $0x148] sm:$0xff]
        %v205 = vld [vmem:[%s135 + $0x150] sm:$0xff]
        %v206 = vld [vmem:[%s135 + $0x158] sm:$0xff]
        %v207 = vld [vmem:[%s135 + $0x160] sm:$0xff]
        %v208 = vld [vmem:[%s135 + $0x168] sm:$0xff]
        %v209 = vld [vmem:[%s135 + $0x170] sm:$0xff]
        %v210 = vld [vmem:[%s135 + $0x178] sm:$0xff]
        %v211 = vld [vmem:[%s135 + $0x180] sm:$0xff]
        %v212 = vld [vmem:[%s135 + $0x188] sm:$0xff]
        %v213 = vld [vmem:[%s135 + $0x190] sm:$0xff]
        %v214 = vld [vmem:[%s135 + $0x198] sm:$0xff]
        %v215 = vld [vmem:[%s135 + $0x1a0] sm:$0xff]
        %v216 = vld [vmem:[%s135 + $0x1a8] sm:$0xff]
        %v217 = vld [vmem:[%s135 + $0x1b0] sm:$0xff]
        %v218 = vld [vmem:[%s135 + $0x1b8] sm:$0xff]
        %v219 = vld [vmem:[%s135 + $0x1c0] sm:$0xff]
        %v220 = vld [vmem:[%s135 + $0x1c8] sm:$0xff]
        %v221 = vld [vmem:[%s135 + $0x1d0] sm:$0xff]
        %v222 = vld [vmem:[%s135 + $0x1d8] sm:$0xff]
        %v223 = vld [vmem:[%s135 + $0x1e0] sm:$0xff]
        %v224 = vld [vmem:[%s135 + $0x1e8] sm:$0xff]
        %v225 = vld [vmem:[%s135 + $0x1f0] sm:$0xff]
        %v226 = vld [vmem:[%s135 + $0x1f8] sm:$0xff]
        %v227 = vld [vmem:[%s135 + $0x200] sm:$0xff]
        %v228 = vld [vmem:[%s135 + $0x208] sm:$0xff]
        %v229 = vld [vmem:[%s135 + $0x210] sm:$0xff]
        %v230 = vld [vmem:[%s135 + $0x218] sm:$0xff]
        %v231 = vld [vmem:[%s135 + $0x220] sm:$0xff]
        %v232 = vld [vmem:[%s135 + $0x228] sm:$0xff]
        %v233 = vld [vmem:[%s135 + $0x230] sm:$0xff]
        %v234 = vld [vmem:[%s135 + $0x238] sm:$0xff]
        %v235 = vld [vmem:[%s135 + $0x240] sm:$0xff]
        %v236 = vld [vmem:[%s135 + $0x248] sm:$0xff]
        %v237 = vld [vmem:[%s135 + $0x250] sm:$0xff]
        %v238 = vld [vmem:[%s135 + $0x258] sm:$0xff]
        %v239 = vld [vmem:[%s135 + $0x260] sm:$0xff]
        %v240 = vld [vmem:[%s135 + $0x268] sm:$0xff]
        %v241 = vld [vmem:[%s135 + $0x270] sm:$0xff]
        %v242 = vld [vmem:[%s135 + $0x278] sm:$0xff]
        %v243 = vld [vmem:[%s135 + $0x280] sm:$0xff]
        %v244 = vld [vmem:[%s135 + $0x288] sm:$0xff]
        %v245 = vld [vmem:[%s135 + $0x290] sm:$0xff]
        %v246 = vld [vmem:[%s135 + $0x298] sm:$0xff]
        %v247 = vld [vmem:[%s135 + $0x2a0] sm:$0xff]
        %v248 = vld [vmem:[%s135 + $0x2a8] sm:$0xff]
        %v249 = vld [vmem:[%s135 + $0x2b0] sm:$0xff]
        %v250 = vld [vmem:[%s135 + $0x2b8] sm:$0xff]
        %v251 = vld [vmem:[%s135 + $0x2c0] sm:$0xff]
        %v252 = vld [vmem:[%s135 + $0x2c8] sm:$0xff]
        %v253 = vld [vmem:[%s135 + $0x2d0] sm:$0xff]
        %v254 = vld [vmem:[%s135 + $0x2d8] sm:$0xff]
        %v255 = vld [vmem:[%s135 + $0x2e0] sm:$0xff]
        %v256 = vld [vmem:[%s135 + $0x2e8] sm:$0xff]
        %v257 = vld [vmem:[%s135 + $0x2f0] sm:$0xff]
        %v258 = vld [vmem:[%s135 + $0x2f8] sm:$0xff]
        %v259 = vld [vmem:[%s135 + $0x300] sm:$0xff]
        %v260 = vld [vmem:[%s135 + $0x308] sm:$0xff]
        %v261 = vld [vmem:[%s135 + $0x310] sm:$0xff]
        %v262 = vld [vmem:[%s135 + $0x318] sm:$0xff]
        %v263 = vld [vmem:[%s135 + $0x320] sm:$0xff]
        %v264 = vld [vmem:[%s135 + $0x328] sm:$0xff]
        %v265 = vld [vmem:[%s135 + $0x330] sm:$0xff]
        %v266 = vld [vmem:[%s135 + $0x338] sm:$0xff]
        %v267 = vld [vmem:[%s135 + $0x340] sm:$0xff]
        %v268 = vld [vmem:[%s135 + $0x348] sm:$0xff]
        %v269 = vld [vmem:[%s135 + $0x350] sm:$0xff]
        %v270 = vld [vmem:[%s135 + $0x358] sm:$0xff]
        %v271 = vld [vmem:[%s135 + $0x360] sm:$0xff]
        %v272 = vld [vmem:[%s135 + $0x368] sm:$0xff]
        %v273 = vld [vmem:[%s135 + $0x370] sm:$0xff]
        %v274 = vld [vmem:[%s135 + $0x378] sm:$0xff]
        %v275 = vld [vmem:[%s135 + $0x380] sm:$0xff]
        %v276 = vld [vmem:[%s135 + $0x388] sm:$0xff]
        %v277 = vld [vmem:[%s135 + $0x390] sm:$0xff]
        %v278 = vld [vmem:[%s135 + $0x398] sm:$0xff]
        %v279 = vld [vmem:[%s135 + $0x3a0] sm:$0xff]
        %v280 = vld [vmem:[%s135 + $0x3a8] sm:$0xff]
        %v281 = vld [vmem:[%s135 + $0x3b0] sm:$0xff]
        %v282 = vld [vmem:[%s135 + $0x3b8] sm:$0xff]
        %v283 = vld [vmem:[%s135 + $0x3c0] sm:$0xff]
        %v284 = vld [vmem:[%s135 + $0x3c8] sm:$0xff]
        %v285 = vld [vmem:[%s135 + $0x3d0] sm:$0xff]
        %v286 = vld [vmem:[%s135 + $0x3d8] sm:$0xff]
        %v287 = vld [vmem:[%s135 + $0x3e0] sm:$0xff]
        %v288 = vld [vmem:[%s135 + $0x3e8] sm:$0xff]
        %v289 = vld [vmem:[%s135 + $0x3f0] sm:$0xff]
        %v290 = vld [vmem:[%s135 + $0x3f8] sm:$0xff]
        %v291 = vld [vmem:[%s135 + $0x400] sm:$0xff]
        %v292 = vld [vmem:[%s135 + $0x408] sm:$0xff]
        %v293 = vld [vmem:[%s135 + $0x410] sm:$0xff]
        %v294 = vld [vmem:[%s135 + $0x418] sm:$0xff]
        %v295 = vld [vmem:[%s135 + $0x420] sm:$0xff]
        %v296 = vld [vmem:[%s135 + $0x428] sm:$0xff]
        %v297 = vld [vmem:[%s135 + $0x430] sm:$0xff]
        %v298 = vld [vmem:[%s135 + $0x438] sm:$0xff]
        %v299 = vld [vmem:[%s135 + $0x440] sm:$0xff]
        %v300 = vld [vmem:[%s135 + $0x448] sm:$0xff]
        %v301 = vld [vmem:[%s135 + $0x450] sm:$0xff]
        %v302 = vld [vmem:[%s135 + $0x458] sm:$0xff]
        %v303 = vld [vmem:[%s135 + $0x460] sm:$0xff]
        %v304 = vld [vmem:[%s135 + $0x468] sm:$0xff]
        %v305 = vld [vmem:[%s135 + $0x470] sm:$0xff]
        %v306 = vld [vmem:[%s135 + $0x478] sm:$0xff]
        %v307 = vld [vmem:[%s135 + $0x480] sm:$0xff]
        %v308 = vld [vmem:[%s135 + $0x488] sm:$0xff]
        %v309 = vld [vmem:[%s135 + $0x490] sm:$0xff]
        %v310 = vld [vmem:[%s135 + $0x498] sm:$0xff]
        %v311 = vld [vmem:[%s135 + $0x4a0] sm:$0xff]
        %v312 = vld [vmem:[%s135 + $0x4a8] sm:$0xff]
        %v313 = vld [vmem:[%s135 + $0x4b0] sm:$0xff]
        %v314 = vld [vmem:[%s135 + $0x4b8] sm:$0xff]
        %v315 = vld [vmem:[%s135 + $0x4c0] sm:$0xff]
        %v316 = vld [vmem:[%s135 + $0x4c8] sm:$0xff]
        %v317 = vld [vmem:[%s135 + $0x4d0] sm:$0xff]
        %v318 = vld [vmem:[%s135 + $0x4d8] sm:$0xff]
        %v319 = vld [vmem:[%s135 + $0x4e0] sm:$0xff]
        %v320 = vld [vmem:[%s135 + $0x4e8] sm:$0xff]
        %v321 = vld [vmem:[%s135 + $0x4f0] sm:$0xff]
        %v322 = vld [vmem:[%s135 + $0x4f8] sm:$0xff]
        %v323 = vld [vmem:[%s135 + $0x500] sm:$0xff]
        %v324 = vld [vmem:[%s135 + $0x508] sm:$0xff]
        %v325 = vld [vmem:[%s135 + $0x510] sm:$0xff]
        %v326 = vld [vmem:[%s135 + $0x518] sm:$0xff]
        %v327 = vld [vmem:[%s135 + $0x520] sm:$0xff]
        %v328 = vld [vmem:[%s135 + $0x528] sm:$0xff]
        %v329 = vld [vmem:[%s135 + $0x530] sm:$0xff]
        %v330 = vld [vmem:[%s135 + $0x538] sm:$0xff]
        %v331 = vld [vmem:[%s135 + $0x540] sm:$0xff]
        %v332 = vld [vmem:[%s135 + $0x548] sm:$0xff]
        %v333 = vld [vmem:[%s135 + $0x550] sm:$0xff]
        %v334 = vld [vmem:[%s135 + $0x558] sm:$0xff]
        %v335 = vld [vmem:[%s135 + $0x560] sm:$0xff]
        %v336 = vld [vmem:[%s135 + $0x568] sm:$0xff]
        %v337 = vld [vmem:[%s135 + $0x570] sm:$0xff]
        %v338 = vld [vmem:[%s135 + $0x578] sm:$0xff]
        %v339 = vld [vmem:[%s135 + $0x580] sm:$0xff]
        %v340 = vld [vmem:[%s135 + $0x588] sm:$0xff]
        %v341 = vld [vmem:[%s135 + $0x590] sm:$0xff]
        %v342 = vld [vmem:[%s135 + $0x598] sm:$0xff]
        %v343 = vld [vmem:[%s135 + $0x5a0] sm:$0xff]
        %v344 = vld [vmem:[%s135 + $0x5a8] sm:$0xff]
        %v345 = vld [vmem:[%s135 + $0x5b0] sm:$0xff]
        %v346 = vld [vmem:[%s135 + $0x5b8] sm:$0xff]
        %v347 = vld [vmem:[%s135 + $0x5c0] sm:$0xff]
        %v348 = vld [vmem:[%s135 + $0x5c8] sm:$0xff]
        %v349 = vld [vmem:[%s135 + $0x5d0] sm:$0xff]
        %v350 = vld [vmem:[%s135 + $0x5d8] sm:$0xff]
        %v351 = vld [vmem:[%s135 + $0x5e0] sm:$0xff]
        %v352 = vld [vmem:[%s135 + $0x5e8] sm:$0xff]
        %v353 = vld [vmem:[%s135 + $0x5f0] sm:$0xff]
        %v354 = vld [vmem:[%s135 + $0x5f8] sm:$0xff]
        %v355 = vld [vmem:[%s135 + $0x600] sm:$0xff]
        %v356 = vld [vmem:[%s135 + $0x608] sm:$0xff]
        %v357 = vld [vmem:[%s135 + $0x610] sm:$0xff]
        %v358 = vld [vmem:[%s135 + $0x618] sm:$0xff]
        %v359 = vld [vmem:[%s135 + $0x620] sm:$0xff]
        %v360 = vld [vmem:[%s135 + $0x628] sm:$0xff]
        %v361 = vld [vmem:[%s135 + $0x630] sm:$0xff]
        %v362 = vld [vmem:[%s135 + $0x638] sm:$0xff]
        %v363 = vld [vmem:[%s135 + $0x640] sm:$0xff]
        %v364 = vld [vmem:[%s135 + $0x648] sm:$0xff]
        %v365 = vld [vmem:[%s135 + $0x650] sm:$0xff]
        %v366 = vld [vmem:[%s135 + $0x658] sm:$0xff]
        %v367 = vld [vmem:[%s135 + $0x660] sm:$0xff]
        %v368 = vld [vmem:[%s135 + $0x668] sm:$0xff]
        %v369 = vld [vmem:[%s135 + $0x670] sm:$0xff]
        %v370 = vld [vmem:[%s135 + $0x678] sm:$0xff]
        %v371 = vld [vmem:[%s135 + $0x680] sm:$0xff]
        %v372 = vld [vmem:[%s135 + $0x688] sm:$0xff]
        %v373 = vld [vmem:[%s135 + $0x690] sm:$0xff]
        %v374 = vld [vmem:[%s135 + $0x698] sm:$0xff]
        %v375 = vld [vmem:[%s135 + $0x6a0] sm:$0xff]
        %v376 = vld [vmem:[%s135 + $0x6a8] sm:$0xff]
        %v377 = vld [vmem:[%s135 + $0x6b0] sm:$0xff]
        %v378 = vld [vmem:[%s135 + $0x6b8] sm:$0xff]
        %v379 = vld [vmem:[%s135 + $0x6c0] sm:$0xff]
        %v380 = vld [vmem:[%s135 + $0x6c8] sm:$0xff]
        %v381 = vld [vmem:[%s135 + $0x6d0] sm:$0xff]
        %v382 = vld [vmem:[%s135 + $0x6d8] sm:$0xff]
        %v383 = vld [vmem:[%s135 + $0x6e0] sm:$0xff]
        %v384 = vld [vmem:[%s135 + $0x6e8] sm:$0xff]
        %v385 = vld [vmem:[%s135 + $0x6f0] sm:$0xff]
        %v386 = vld [vmem:[%s135 + $0x6f8] sm:$0xff]
        %v387 = vld [vmem:[%s135 + $0x700] sm:$0xff]
        %v388 = vld [vmem:[%s135 + $0x708] sm:$0xff]
        %v389 = vld [vmem:[%s135 + $0x710] sm:$0xff]
        %v390 = vld [vmem:[%s135 + $0x718] sm:$0xff]
        %v391 = vld [vmem:[%s135 + $0x720] sm:$0xff]
        %v392 = vld [vmem:[%s135 + $0x728] sm:$0xff]
        %v393 = vld [vmem:[%s135 + $0x730] sm:$0xff]
        %v394 = vld [vmem:[%s135 + $0x738] sm:$0xff]
        %v395 = vld [vmem:[%s135 + $0x740] sm:$0xff]
        %v396 = vld [vmem:[%s135 + $0x748] sm:$0xff]
        %v397 = vld [vmem:[%s135 + $0x750] sm:$0xff]
        %v398 = vld [vmem:[%s135 + $0x758] sm:$0xff]
        %v399 = vld [vmem:[%s135 + $0x760] sm:$0xff]
        %v400 = vld [vmem:[%s135 + $0x768] sm:$0xff]
        %v401 = vld [vmem:[%s135 + $0x770] sm:$0xff]
        %v402 = vld [vmem:[%s135 + $0x778] sm:$0xff]
        %v403 = vld [vmem:[%s135 + $0x780] sm:$0xff]
        %v404 = vld [vmem:[%s135 + $0x788] sm:$0xff]
        %v405 = vld [vmem:[%s135 + $0x790] sm:$0xff]
        %v406 = vld [vmem:[%s135 + $0x798] sm:$0xff]
        %v407 = vld [vmem:[%s135 + $0x7a0] sm:$0xff]
        %v408 = vld [vmem:[%s135 + $0x7a8] sm:$0xff]
        %v409 = vld [vmem:[%s135 + $0x7b0] sm:$0xff]
        %v410 = vld [vmem:[%s135 + $0x7b8] sm:$0xff]
        %v411 = vld [vmem:[%s135 + $0x7c0] sm:$0xff]
        %v412 = vld [vmem:[%s135 + $0x7c8] sm:$0xff]
        %v413 = vld [vmem:[%s135 + $0x7d0] sm:$0xff]
        %v414 = vld [vmem:[%s135 + $0x7d8] sm:$0xff]
        %v415 = vld [vmem:[%s135 + $0x7e0] sm:$0xff]
        %v416 = vld [vmem:[%s135 + $0x7e8] sm:$0xff]
        %v417 = vld [vmem:[%s135 + $0x7f0] sm:$0xff]
        %v418 = vld [vmem:[%s135 + $0x7f8] sm:$0xff]
        %419 = vmatpush.msra.mxu0 %v193
        %420 = vmatpush.msra.mxu0 %v191
        %421 = vmatpush.msra.mxu0 %v189
        %422 = vmatpush.msra.mxu0 %v187
        %423 = vmatpush.msra.mxu0 %v185
        %424 = vmatpush.msra.mxu0 %v183
        %425 = vmatpush.msra.mxu0 %v181
        %426 = vmatpush.msra.mxu0 %v179
        %427 = vmatpush.msra.mxu0 %v177
        %428 = vmatpush.msra.mxu0 %v175
        %429 = vmatpush.msra.mxu0 %v173
        %430 = vmatpush.msra.mxu0 %v171
        %431 = vmatpush.msra.mxu0 %v169
        %432 = vmatpush.msra.mxu0 %v167
        %433 = vmatpush.msra.mxu0 %v165
        %434 = vmatpush.msra.mxu0 %v163
        %435 = vmatmul.f32.gmra.mxu0 1.0
        %v436 = vpop.f32.mrf.mxu0
        %v437 = vadd.f32 0.0, %v436
        %438 = vdwg.mxu0
        %439 = vmatpush.msra.mxu0 %v225
        %440 = vmatpush.msra.mxu0 %v223
        %441 = vmatpush.msra.mxu0 %v221
        %442 = vmatpush.msra.mxu0 %v219
        %443 = vmatpush.msra.mxu0 %v217
        %444 = vmatpush.msra.mxu0 %v215
        %445 = vmatpush.msra.mxu0 %v213
        %446 = vmatpush.msra.mxu0 %v211
        %447 = vmatpush.msra.mxu0 %v209
        %448 = vmatpush.msra.mxu0 %v207
        %449 = vmatpush.msra.mxu0 %v205
        %450 = vmatpush.msra.mxu0 %v203
        %451 = vmatpush.msra.mxu0 %v201
        %452 = vmatpush.msra.mxu0 %v199
        %453 = vmatpush.msra.mxu0 %v197
        %454 = vmatpush.msra.mxu0 %v195
        %455 = vmatmul.f32.gmra.mxu0 1.0
        %v456 = vpop.f32.mrf.mxu0
        %v457 = vadd.f32 %v437, %v456
        %458 = vdwg.mxu0
        %459 = vmatpush.msra.mxu0 %v257
        %460 = vmatpush.msra.mxu0 %v255
        %461 = vmatpush.msra.mxu0 %v253
        %462 = vmatpush.msra.mxu0 %v251
        %463 = vmatpush.msra.mxu0 %v249
        %464 = vmatpush.msra.mxu0 %v247
        %465 = vmatpush.msra.mxu0 %v245
        %466 = vmatpush.msra.mxu0 %v243
        %467 = vmatpush.msra.mxu0 %v241
        %468 = vmatpush.msra.mxu0 %v239
        %469 = vmatpush.msra.mxu0 %v237
        %470 = vmatpush.msra.mxu0 %v235
        %471 = vmatpush.msra.mxu0 %v233
        %472 = vmatpush.msra.mxu0 %v231
        %473 = vmatpush.msra.mxu0 %v229
        %474 = vmatpush.msra.mxu0 %v227
        %475 = vmatmul.f32.gmra.mxu0 1.0
        %v476 = vpop.f32.mrf.mxu0
        %v477 = vadd.f32 %v457, %v476
        %478 = vdwg.mxu0
        %479 = vmatpush.msra.mxu0 %v289
        %480 = vmatpush.msra.mxu0 %v287
        %481 = vmatpush.msra.mxu0 %v285
        %482 = vmatpush.msra.mxu0 %v283
        %483 = vmatpush.msra.mxu0 %v281
        %484 = vmatpush.msra.mxu0 %v279
        %485 = vmatpush.msra.mxu0 %v277
        %486 = vmatpush.msra.mxu0 %v275
        %487 = vmatpush.msra.mxu0 %v273
        %488 = vmatpush.msra.mxu0 %v271
        %489 = vmatpush.msra.mxu0 %v269
        %490 = vmatpush.msra.mxu0 %v267
        %491 = vmatpush.msra.mxu0 %v265
        %492 = vmatpush.msra.mxu0 %v263
        %493 = vmatpush.msra.mxu0 %v261
        %494 = vmatpush.msra.mxu0 %v259
        %495 = vmatmul.f32.gmra.mxu0 1.0
        %v496 = vpop.f32.mrf.mxu0
        %v497 = vadd.f32 %v477, %v496
        %498 = vdwg.mxu0
        %499 = vmatpush.msra.mxu0 %v321
        %500 = vmatpush.msra.mxu0 %v319
        %501 = vmatpush.msra.mxu0 %v317
        %502 = vmatpush.msra.mxu0 %v315
        %503 = vmatpush.msra.mxu0 %v313
        %504 = vmatpush.msra.mxu0 %v311
        %505 = vmatpush.msra.mxu0 %v309
        %506 = vmatpush.msra.mxu0 %v307
        %507 = vmatpush.msra.mxu0 %v305
        %508 = vmatpush.msra.mxu0 %v303
        %509 = vmatpush.msra.mxu0 %v301
        %510 = vmatpush.msra.mxu0 %v299
        %511 = vmatpush.msra.mxu0 %v297
        %512 = vmatpush.msra.mxu0 %v295
        %513 = vmatpush.msra.mxu0 %v293
        %514 = vmatpush.msra.mxu0 %v291
        %515 = vmatmul.f32.gmra.mxu0 1.0
        %v516 = vpop.f32.mrf.mxu0
        %v517 = vadd.f32 %v497, %v516
        %518 = vdwg.mxu0
        %519 = vmatpush.msra.mxu0 %v353
        %520 = vmatpush.msra.mxu0 %v351
        %521 = vmatpush.msra.mxu0 %v349
        %522 = vmatpush.msra.mxu0 %v347
        %523 = vmatpush.msra.mxu0 %v345
        %524 = vmatpush.msra.mxu0 %v343
        %525 = vmatpush.msra.mxu0 %v341
        %526 = vmatpush.msra.mxu0 %v339
        %527 = vmatpush.msra.mxu0 %v337
        %528 = vmatpush.msra.mxu0 %v335
        %529 = vmatpush.msra.mxu0 %v333
        %530 = vmatpush.msra.mxu0 %v331
        %531 = vmatpush.msra.mxu0 %v329
        %532 = vmatpush.msra.mxu0 %v327
        %533 = vmatpush.msra.mxu0 %v325
        %534 = vmatpush.msra.mxu0 %v323
        %535 = vmatmul.f32.gmra.mxu0 1.0
        %v536 = vpop.f32.mrf.mxu0
        %v537 = vadd.f32 %v517, %v536
        %538 = vdwg.mxu0
        %539 = vmatpush.msra.mxu0 %v385
        %540 = vmatpush.msra.mxu0 %v383
        %541 = vmatpush.msra.mxu0 %v381
        %542 = vmatpush.msra.mxu0 %v379
        %543 = vmatpush.msra.mxu0 %v377
        %544 = vmatpush.msra.mxu0 %v375
        %545 = vmatpush.msra.mxu0 %v373
        %546 = vmatpush.msra.mxu0 %v371
        %547 = vmatpush.msra.mxu0 %v369
        %548 = vmatpush.msra.mxu0 %v367
        %549 = vmatpush.msra.mxu0 %v365
        %550 = vmatpush.msra.mxu0 %v363
        %551 = vmatpush.msra.mxu0 %v361
        %552 = vmatpush.msra.mxu0 %v359
        %553 = vmatpush.msra.mxu0 %v357
        %554 = vmatpush.msra.mxu0 %v355
        %555 = vmatmul.f32.gmra.mxu0 1.0
        %v556 = vpop.f32.mrf.mxu0
        %v557 = vadd.f32 %v537, %v556
        %558 = vdwg.mxu0
        %559 = vmatpush.msra.mxu0 %v417
        %560 = vmatpush.msra.mxu0 %v415
        %561 = vmatpush.msra.mxu0 %v413
        %562 = vmatpush.msra.mxu0 %v411
        %563 = vmatpush.msra.mxu0 %v409
        %564 = vmatpush.msra.mxu0 %v407
        %565 = vmatpush.msra.mxu0 %v405
        %566 = vmatpush.msra.mxu0 %v403
        %567 = vmatpush.msra.mxu0 %v401
        %568 = vmatpush.msra.mxu0 %v399
        %569 = vmatpush.msra.mxu0 %v397
        %570 = vmatpush.msra.mxu0 %v395
        %571 = vmatpush.msra.mxu0 %v393
        %572 = vmatpush.msra.mxu0 %v391
        %573 = vmatpush.msra.mxu0 %v389
        %574 = vmatpush.msra.mxu0 %v387
        %575 = vmatmul.f32.gmra.mxu0 1.0
        %v576 = vpop.f32.mrf.mxu0
        %v577 = vadd.f32 %v557, %v576
        %578 = vdwg.mxu0
        %579 = vmatpush.msra.mxu0 %v194
        %580 = vmatpush.msra.mxu0 %v192
        %581 = vmatpush.msra.mxu0 %v190
        %582 = vmatpush.msra.mxu0 %v188
        %583 = vmatpush.msra.mxu0 %v186
        %584 = vmatpush.msra.mxu0 %v184
        %585 = vmatpush.msra.mxu0 %v182
        %586 = vmatpush.msra.mxu0 %v180
        %587 = vmatpush.msra.mxu0 %v178
        %588 = vmatpush.msra.mxu0 %v176
        %589 = vmatpush.msra.mxu0 %v174
        %590 = vmatpush.msra.mxu0 %v172
        %591 = vmatpush.msra.mxu0 %v170
        %592 = vmatpush.msra.mxu0 %v168
        %593 = vmatpush.msra.mxu0 %v166
        %594 = vmatpush.msra.mxu0 %v164
        %595 = vmatmul.f32.gmra.mxu0 1.0
        %v596 = vpop.f32.mrf.mxu0
        %v597 = vadd.f32 0.0, %v596
        %598 = vdwg.mxu0
        %599 = vmatpush.msra.mxu0 %v226
        %600 = vmatpush.msra.mxu0 %v224
        %601 = vmatpush.msra.mxu0 %v222
        %602 = vmatpush.msra.mxu0 %v220
        %603 = vmatpush.msra.mxu0 %v218
        %604 = vmatpush.msra.mxu0 %v216
        %605 = vmatpush.msra.mxu0 %v214
        %606 = vmatpush.msra.mxu0 %v212
        %607 = vmatpush.msra.mxu0 %v210
        %608 = vmatpush.msra.mxu0 %v208
        %609 = vmatpush.msra.mxu0 %v206
        %610 = vmatpush.msra.mxu0 %v204
        %611 = vmatpush.msra.mxu0 %v202
        %612 = vmatpush.msra.mxu0 %v200
        %613 = vmatpush.msra.mxu0 %v198
        %614 = vmatpush.msra.mxu0 %v196
        %615 = vmatmul.f32.gmra.mxu0 1.0
        %v616 = vpop.f32.mrf.mxu0
        %v617 = vadd.f32 %v597, %v616
        %618 = vdwg.mxu0
        %619 = vmatpush.msra.mxu0 %v258
        %620 = vmatpush.msra.mxu0 %v256
        %621 = vmatpush.msra.mxu0 %v254
        %622 = vmatpush.msra.mxu0 %v252
        %623 = vmatpush.msra.mxu0 %v250
        %624 = vmatpush.msra.mxu0 %v248
        %625 = vmatpush.msra.mxu0 %v246
        %626 = vmatpush.msra.mxu0 %v244
        %627 = vmatpush.msra.mxu0 %v242
        %628 = vmatpush.msra.mxu0 %v240
        %629 = vmatpush.msra.mxu0 %v238
        %630 = vmatpush.msra.mxu0 %v236
        %631 = vmatpush.msra.mxu0 %v234
        %632 = vmatpush.msra.mxu0 %v232
        %633 = vmatpush.msra.mxu0 %v230
        %634 = vmatpush.msra.mxu0 %v228
        %635 = vmatmul.f32.gmra.mxu0 1.0
        %v636 = vpop.f32.mrf.mxu0
        %v637 = vadd.f32 %v617, %v636
        %638 = vdwg.mxu0
        %639 = vmatpush.msra.mxu0 %v290
        %640 = vmatpush.msra.mxu0 %v288
        %641 = vmatpush.msra.mxu0 %v286
        %642 = vmatpush.msra.mxu0 %v284
        %643 = vmatpush.msra.mxu0 %v282
        %644 = vmatpush.msra.mxu0 %v280
        %645 = vmatpush.msra.mxu0 %v278
        %646 = vmatpush.msra.mxu0 %v276
        %647 = vmatpush.msra.mxu0 %v274
        %648 = vmatpush.msra.mxu0 %v272
        %649 = vmatpush.msra.mxu0 %v270
        %650 = vmatpush.msra.mxu0 %v268
        %651 = vmatpush.msra.mxu0 %v266
        %652 = vmatpush.msra.mxu0 %v264
        %653 = vmatpush.msra.mxu0 %v262
        %654 = vmatpush.msra.mxu0 %v260
        %655 = vmatmul.f32.gmra.mxu0 1.0
        %v656 = vpop.f32.mrf.mxu0
        %v657 = vadd.f32 %v637, %v656
        %658 = vdwg.mxu0
        %659 = vmatpush.msra.mxu0 %v322
        %660 = vmatpush.msra.mxu0 %v320
        %661 = vmatpush.msra.mxu0 %v318
        %662 = vmatpush.msra.mxu0 %v316
        %663 = vmatpush.msra.mxu0 %v314
        %664 = vmatpush.msra.mxu0 %v312
        %665 = vmatpush.msra.mxu0 %v310
        %666 = vmatpush.msra.mxu0 %v308
        %667 = vmatpush.msra.mxu0 %v306
        %668 = vmatpush.msra.mxu0 %v304
        %669 = vmatpush.msra.mxu0 %v302
        %670 = vmatpush.msra.mxu0 %v300
        %671 = vmatpush.msra.mxu0 %v298
        %672 = vmatpush.msra.mxu0 %v296
        %673 = vmatpush.msra.mxu0 %v294
        %674 = vmatpush.msra.mxu0 %v292
        %675 = vmatmul.f32.gmra.mxu0 1.0
        %v676 = vpop.f32.mrf.mxu0
        %v677 = vadd.f32 %v657, %v676
        %678 = vdwg.mxu0
        %679 = vmatpush.msra.mxu0 %v354
        %680 = vmatpush.msra.mxu0 %v352
        %681 = vmatpush.msra.mxu0 %v350
        %682 = vmatpush.msra.mxu0 %v348
        %683 = vmatpush.msra.mxu0 %v346
        %684 = vmatpush.msra.mxu0 %v344
        %685 = vmatpush.msra.mxu0 %v342
        %686 = vmatpush.msra.mxu0 %v340
        %687 = vmatpush.msra.mxu0 %v338
        %688 = vmatpush.msra.mxu0 %v336
        %689 = vmatpush.msra.mxu0 %v334
        %690 = vmatpush.msra.mxu0 %v332
        %691 = vmatpush.msra.mxu0 %v330
        %692 = vmatpush.msra.mxu0 %v328
        %693 = vmatpush.msra.mxu0 %v326
        %694 = vmatpush.msra.mxu0 %v324
        %695 = vmatmul.f32.gmra.mxu0 1.0
        %v696 = vpop.f32.mrf.mxu0
        %v697 = vadd.f32 %v677, %v696
        %698 = vdwg.mxu0
        %699 = vmatpush.msra.mxu0 %v386
        %700 = vmatpush.msra.mxu0 %v384
        %701 = vmatpush.msra.mxu0 %v382
        %702 = vmatpush.msra.mxu0 %v380
        %703 = vmatpush.msra.mxu0 %v378
        %704 = vmatpush.msra.mxu0 %v376
        %705 = vmatpush.msra.mxu0 %v374
        %706 = vmatpush.msra.mxu0 %v372
        %707 = vmatpush.msra.mxu0 %v370
        %708 = vmatpush.msra.mxu0 %v368
        %709 = vmatpush.msra.mxu0 %v366
        %710 = vmatpush.msra.mxu0 %v364
        %711 = vmatpush.msra.mxu0 %v362
        %712 = vmatpush.msra.mxu0 %v360
        %713 = vmatpush.msra.mxu0 %v358
        %714 = vmatpush.msra.mxu0 %v356
        %715 = vmatmul.f32.gmra.mxu0 1.0
        %v716 = vpop.f32.mrf.mxu0
        %v717 = vadd.f32 %v697, %v716
        %718 = vdwg.mxu0
        %719 = vmatpush.msra.mxu0 %v418
        %720 = vmatpush.msra.mxu0 %v416
        %721 = vmatpush.msra.mxu0 %v414
        %722 = vmatpush.msra.mxu0 %v412
        %723 = vmatpush.msra.mxu0 %v410
        %724 = vmatpush.msra.mxu0 %v408
        %725 = vmatpush.msra.mxu0 %v406
        %726 = vmatpush.msra.mxu0 %v404
        %727 = vmatpush.msra.mxu0 %v402
        %728 = vmatpush.msra.mxu0 %v400
        %729 = vmatpush.msra.mxu0 %v398
        %730 = vmatpush.msra.mxu0 %v396
        %731 = vmatpush.msra.mxu0 %v394
        %732 = vmatpush.msra.mxu0 %v392
        %733 = vmatpush.msra.mxu0 %v390
        %734 = vmatpush.msra.mxu0 %v388
        %735 = vmatmul.f32.gmra.mxu0 1.0
        %v736 = vpop.f32.mrf.mxu0
        %v737 = vadd.f32 %v717, %v736
        %738 = vdwg.mxu0
        %v739 = vmul.f32 %v163, %v163
        %v740 = vmul.f32 %v164, %v164
        %v741 = vmul.f32 %v165, %v165
        %v742 = vmul.f32 %v166, %v166
        %v743 = vmul.f32 %v167, %v167
        %v744 = vmul.f32 %v168, %v168
        %v745 = vmul.f32 %v169, %v169
        %v746 = vmul.f32 %v170, %v170
        %v747 = vmul.f32 %v171, %v171
        %v748 = vmul.f32 %v172, %v172
        %v749 = vmul.f32 %v173, %v173
        %v750 = vmul.f32 %v174, %v174
        %v751 = vmul.f32 %v175, %v175
        %v752 = vmul.f32 %v176, %v176
        %v753 = vmul.f32 %v177, %v177
        %v754 = vmul.f32 %v178, %v178
        %v755 = vmul.f32 %v179, %v179
        %v756 = vmul.f32 %v180, %v180
        %v757 = vmul.f32 %v181, %v181
        %v758 = vmul.f32 %v182, %v182
        %v759 = vmul.f32 %v183, %v183
        %v760 = vmul.f32 %v184, %v184
        %v761 = vmul.f32 %v185, %v185
        %v762 = vmul.f32 %v186, %v186
        %v763 = vmul.f32 %v187, %v187
        %v764 = vmul.f32 %v188, %v188
        %v765 = vmul.f32 %v189, %v189
        %v766 = vmul.f32 %v190, %v190
        %v767 = vmul.f32 %v191, %v191
        %v768 = vmul.f32 %v192, %v192
        %v769 = vmul.f32 %v193, %v193
        %v770 = vmul.f32 %v194, %v194
        %v771 = vmul.f32 %v195, %v195
        %v772 = vmul.f32 %v196, %v196
        %v773 = vmul.f32 %v197, %v197
        %v774 = vmul.f32 %v198, %v198
        %v775 = vmul.f32 %v199, %v199
        %v776 = vmul.f32 %v200, %v200
        %v777 = vmul.f32 %v201, %v201
        %v778 = vmul.f32 %v202, %v202
        %v779 = vmul.f32 %v203, %v203
        %v780 = vmul.f32 %v204, %v204
        %v781 = vmul.f32 %v205, %v205
        %v782 = vmul.f32 %v206, %v206
        %v783 = vmul.f32 %v207, %v207
        %v784 = vmul.f32 %v208, %v208
        %v785 = vmul.f32 %v209, %v209
        %v786 = vmul.f32 %v210, %v210
        %v787 = vmul.f32 %v211, %v211
        %v788 = vmul.f32 %v212, %v212
        %v789 = vmul.f32 %v213, %v213
        %v790 = vmul.f32 %v214, %v214
        %v791 = vmul.f32 %v215, %v215
        %v792 = vmul.f32 %v216, %v216
        %v793 = vmul.f32 %v217, %v217
        %v794 = vmul.f32 %v218, %v218
        %v795 = vmul.f32 %v219, %v219
        %v796 = vmul.f32 %v220, %v220
        %v797 = vmul.f32 %v221, %v221
        %v798 = vmul.f32 %v222, %v222
        %v799 = vmul.f32 %v223, %v223
        %v800 = vmul.f32 %v224, %v224
        %v801 = vmul.f32 %v225, %v225
        %v802 = vmul.f32 %v226, %v226
        %v803 = vmul.f32 %v227, %v227
        %v804 = vmul.f32 %v228, %v228
        %v805 = vmul.f32 %v229, %v229
        %v806 = vmul.f32 %v230, %v230
        %v807 = vmul.f32 %v231, %v231
        %v808 = vmul.f32 %v232, %v232
        %v809 = vmul.f32 %v233, %v233
        %v810 = vmul.f32 %v234, %v234
        %v811 = vmul.f32 %v235, %v235
        %v812 = vmul.f32 %v236, %v236
        %v813 = vmul.f32 %v237, %v237
        %v814 = vmul.f32 %v238, %v238
        %v815 = vmul.f32 %v239, %v239
        %v816 = vmul.f32 %v240, %v240
        %v817 = vmul.f32 %v241, %v241
        %v818 = vmul.f32 %v242, %v242
        %v819 = vmul.f32 %v243, %v243
        %v820 = vmul.f32 %v244, %v244
        %v821 = vmul.f32 %v245, %v245
        %v822 = vmul.f32 %v246, %v246
        %v823 = vmul.f32 %v247, %v247
        %v824 = vmul.f32 %v248, %v248
        %v825 = vmul.f32 %v249, %v249
        %v826 = vmul.f32 %v250, %v250
        %v827 = vmul.f32 %v251, %v251
        %v828 = vmul.f32 %v252, %v252
        %v829 = vmul.f32 %v253, %v253
        %v830 = vmul.f32 %v254, %v254
        %v831 = vmul.f32 %v255, %v255
        %v832 = vmul.f32 %v256, %v256
        %v833 = vmul.f32 %v257, %v257
        %v834 = vmul.f32 %v258, %v258
        %v835 = vmul.f32 %v259, %v259
        %v836 = vmul.f32 %v260, %v260
        %v837 = vmul.f32 %v261, %v261
        %v838 = vmul.f32 %v262, %v262
        %v839 = vmul.f32 %v263, %v263
        %v840 = vmul.f32 %v264, %v264
        %v841 = vmul.f32 %v265, %v265
        %v842 = vmul.f32 %v266, %v266
        %v843 = vmul.f32 %v267, %v267
        %v844 = vmul.f32 %v268, %v268
        %v845 = vmul.f32 %v269, %v269
        %v846 = vmul.f32 %v270, %v270
        %v847 = vmul.f32 %v271, %v271
        %v848 = vmul.f32 %v272, %v272
        %v849 = vmul.f32 %v273, %v273
        %v850 = vmul.f32 %v274, %v274
        %v851 = vmul.f32 %v275, %v275
        %v852 = vmul.f32 %v276, %v276
        %v853 = vmul.f32 %v277, %v277
        %v854 = vmul.f32 %v278, %v278
        %v855 = vmul.f32 %v279, %v279
        %v856 = vmul.f32 %v280, %v280
        %v857 = vmul.f32 %v281, %v281
        %v858 = vmul.f32 %v282, %v282
        %v859 = vmul.f32 %v283, %v283
        %v860 = vmul.f32 %v284, %v284
        %v861 = vmul.f32 %v285, %v285
        %v862 = vmul.f32 %v286, %v286
        %v863 = vmul.f32 %v287, %v287
        %v864 = vmul.f32 %v288, %v288
        %v865 = vmul.f32 %v289, %v289
        %v866 = vmul.f32 %v290, %v290
        %v867 = vmul.f32 %v291, %v291
        %v868 = vmul.f32 %v292, %v292
        %v869 = vmul.f32 %v293, %v293
        %v870 = vmul.f32 %v294, %v294
        %v871 = vmul.f32 %v295, %v295
        %v872 = vmul.f32 %v296, %v296
        %v873 = vmul.f32 %v297, %v297
        %v874 = vmul.f32 %v298, %v298
        %v875 = vmul.f32 %v299, %v299
        %v876 = vmul.f32 %v300, %v300
        %v877 = vmul.f32 %v301, %v301
        %v878 = vmul.f32 %v302, %v302
        %v879 = vmul.f32 %v303, %v303
        %v880 = vmul.f32 %v304, %v304
        %v881 = vmul.f32 %v305, %v305
        %v882 = vmul.f32 %v306, %v306
        %v883 = vmul.f32 %v307, %v307
        %v884 = vmul.f32 %v308, %v308
        %v885 = vmul.f32 %v309, %v309
        %v886 = vmul.f32 %v310, %v310
        %v887 = vmul.f32 %v311, %v311
        %v888 = vmul.f32 %v312, %v312
        %v889 = vmul.f32 %v313, %v313
        %v890 = vmul.f32 %v314, %v314
        %v891 = vmul.f32 %v315, %v315
        %v892 = vmul.f32 %v316, %v316
        %v893 = vmul.f32 %v317, %v317
        %v894 = vmul.f32 %v318, %v318
        %v895 = vmul.f32 %v319, %v319
        %v896 = vmul.f32 %v320, %v320
        %v897 = vmul.f32 %v321, %v321
        %v898 = vmul.f32 %v322, %v322
        %v899 = vmul.f32 %v323, %v323
        %v900 = vmul.f32 %v324, %v324
        %v901 = vmul.f32 %v325, %v325
        %v902 = vmul.f32 %v326, %v326
        %v903 = vmul.f32 %v327, %v327
        %v904 = vmul.f32 %v328, %v328
        %v905 = vmul.f32 %v329, %v329
        %v906 = vmul.f32 %v330, %v330
        %v907 = vmul.f32 %v331, %v331
        %v908 = vmul.f32 %v332, %v332
        %v909 = vmul.f32 %v333, %v333
        %v910 = vmul.f32 %v334, %v334
        %v911 = vmul.f32 %v335, %v335
        %v912 = vmul.f32 %v336, %v336
        %v913 = vmul.f32 %v337, %v337
        %v914 = vmul.f32 %v338, %v338
        %v915 = vmul.f32 %v339, %v339
        %v916 = vmul.f32 %v340, %v340
        %v917 = vmul.f32 %v341, %v341
        %v918 = vmul.f32 %v342, %v342
        %v919 = vmul.f32 %v343, %v343
        %v920 = vmul.f32 %v344, %v344
        %v921 = vmul.f32 %v345, %v345
        %v922 = vmul.f32 %v346, %v346
        %v923 = vmul.f32 %v347, %v347
        %v924 = vmul.f32 %v348, %v348
        %v925 = vmul.f32 %v349, %v349
        %v926 = vmul.f32 %v350, %v350
        %v927 = vmul.f32 %v351, %v351
        %v928 = vmul.f32 %v352, %v352
        %v929 = vmul.f32 %v353, %v353
        %v930 = vmul.f32 %v354, %v354
        %v931 = vmul.f32 %v355, %v355
        %v932 = vmul.f32 %v356, %v356
        %v933 = vmul.f32 %v357, %v357
        %v934 = vmul.f32 %v358, %v358
        %v935 = vmul.f32 %v359, %v359
        %v936 = vmul.f32 %v360, %v360
        %v937 = vmul.f32 %v361, %v361
        %v938 = vmul.f32 %v362, %v362
        %v939 = vmul.f32 %v363, %v363
        %v940 = vmul.f32 %v364, %v364
        %v941 = vmul.f32 %v365, %v365
        %v942 = vmul.f32 %v366, %v366
        %v943 = vmul.f32 %v367, %v367
        %v944 = vmul.f32 %v368, %v368
        %v945 = vmul.f32 %v369, %v369
        %v946 = vmul.f32 %v370, %v370
        %v947 = vmul.f32 %v371, %v371
        %v948 = vmul.f32 %v372, %v372
        %v949 = vmul.f32 %v373, %v373
        %v950 = vmul.f32 %v374, %v374
        %v951 = vmul.f32 %v375, %v375
        %v952 = vmul.f32 %v376, %v376
        %v953 = vmul.f32 %v377, %v377
        %v954 = vmul.f32 %v378, %v378
        %v955 = vmul.f32 %v379, %v379
        %v956 = vmul.f32 %v380, %v380
        %v957 = vmul.f32 %v381, %v381
        %v958 = vmul.f32 %v382, %v382
        %v959 = vmul.f32 %v383, %v383
        %v960 = vmul.f32 %v384, %v384
        %v961 = vmul.f32 %v385, %v385
        %v962 = vmul.f32 %v386, %v386
        %v963 = vmul.f32 %v387, %v387
        %v964 = vmul.f32 %v388, %v388
        %v965 = vmul.f32 %v389, %v389
        %v966 = vmul.f32 %v390, %v390
        %v967 = vmul.f32 %v391, %v391
        %v968 = vmul.f32 %v392, %v392
        %v969 = vmul.f32 %v393, %v393
        %v970 = vmul.f32 %v394, %v394
        %v971 = vmul.f32 %v395, %v395
        %v972 = vmul.f32 %v396, %v396
        %v973 = vmul.f32 %v397, %v397
        %v974 = vmul.f32 %v398, %v398
        %v975 = vmul.f32 %v399, %v399
        %v976 = vmul.f32 %v400, %v400
        %v977 = vmul.f32 %v401, %v401
        %v978 = vmul.f32 %v402, %v402
        %v979 = vmul.f32 %v403, %v403
        %v980 = vmul.f32 %v404, %v404
        %v981 = vmul.f32 %v405, %v405
        %v982 = vmul.f32 %v406, %v406
        %v983 = vmul.f32 %v407, %v407
        %v984 = vmul.f32 %v408, %v408
        %v985 = vmul.f32 %v409, %v409
        %v986 = vmul.f32 %v410, %v410
        %v987 = vmul.f32 %v411, %v411
        %v988 = vmul.f32 %v412, %v412
        %v989 = vmul.f32 %v413, %v413
        %v990 = vmul.f32 %v414, %v414
        %v991 = vmul.f32 %v415, %v415
        %v992 = vmul.f32 %v416, %v416
        %v993 = vmul.f32 %v417, %v417
        %v994 = vmul.f32 %v418, %v418
        %995 = vmatpush.msra.mxu0 %v769
        %996 = vmatpush.msra.mxu0 %v767
        %997 = vmatpush.msra.mxu0 %v765
        %998 = vmatpush.msra.mxu0 %v763
        %999 = vmatpush.msra.mxu0 %v761
        %1000 = vmatpush.msra.mxu0 %v759
        %1001 = vmatpush.msra.mxu0 %v757
        %1002 = vmatpush.msra.mxu0 %v755
        %1003 = vmatpush.msra.mxu0 %v753
        %1004 = vmatpush.msra.mxu0 %v751
        %1005 = vmatpush.msra.mxu0 %v749
        %1006 = vmatpush.msra.mxu0 %v747
        %1007 = vmatpush.msra.mxu0 %v745
        %1008 = vmatpush.msra.mxu0 %v743
        %1009 = vmatpush.msra.mxu0 %v741
        %1010 = vmatpush.msra.mxu0 %v739
        %1011 = vmatmul.f32.gmra.mxu0 1.0
        %v1012 = vpop.f32.mrf.mxu0
        %v1013 = vadd.f32 0.0, %v1012
        %1014 = vdwg.mxu0
        %1015 = vmatpush.msra.mxu0 %v801
        %1016 = vmatpush.msra.mxu0 %v799
        %1017 = vmatpush.msra.mxu0 %v797
        %1018 = vmatpush.msra.mxu0 %v795
        %1019 = vmatpush.msra.mxu0 %v793
        %1020 = vmatpush.msra.mxu0 %v791
        %1021 = vmatpush.msra.mxu0 %v789
        %1022 = vmatpush.msra.mxu0 %v787
        %1023 = vmatpush.msra.mxu0 %v785
        %1024 = vmatpush.msra.mxu0 %v783
        %1025 = vmatpush.msra.mxu0 %v781
        %1026 = vmatpush.msra.mxu0 %v779
        %1027 = vmatpush.msra.mxu0 %v777
        %1028 = vmatpush.msra.mxu0 %v775
        %1029 = vmatpush.msra.mxu0 %v773
        %1030 = vmatpush.msra.mxu0 %v771
        %1031 = vmatmul.f32.gmra.mxu0 1.0
        %v1032 = vpop.f32.mrf.mxu0
        %v1033 = vadd.f32 %v1013, %v1032
        %1034 = vdwg.mxu0
        %1035 = vmatpush.msra.mxu0 %v833
        %1036 = vmatpush.msra.mxu0 %v831
        %1037 = vmatpush.msra.mxu0 %v829
        %1038 = vmatpush.msra.mxu0 %v827
        %1039 = vmatpush.msra.mxu0 %v825
        %1040 = vmatpush.msra.mxu0 %v823
        %1041 = vmatpush.msra.mxu0 %v821
        %1042 = vmatpush.msra.mxu0 %v819
        %1043 = vmatpush.msra.mxu0 %v817
        %1044 = vmatpush.msra.mxu0 %v815
        %1045 = vmatpush.msra.mxu0 %v813
        %1046 = vmatpush.msra.mxu0 %v811
        %1047 = vmatpush.msra.mxu0 %v809
        %1048 = vmatpush.msra.mxu0 %v807
        %1049 = vmatpush.msra.mxu0 %v805
        %1050 = vmatpush.msra.mxu0 %v803
        %1051 = vmatmul.f32.gmra.mxu0 1.0
        %v1052 = vpop.f32.mrf.mxu0
        %v1053 = vadd.f32 %v1033, %v1052
        %1054 = vdwg.mxu0
        %1055 = vmatpush.msra.mxu0 %v865
        %1056 = vmatpush.msra.mxu0 %v863
        %1057 = vmatpush.msra.mxu0 %v861
        %1058 = vmatpush.msra.mxu0 %v859
        %1059 = vmatpush.msra.mxu0 %v857
        %1060 = vmatpush.msra.mxu0 %v855
        %1061 = vmatpush.msra.mxu0 %v853
        %1062 = vmatpush.msra.mxu0 %v851
        %1063 = vmatpush.msra.mxu0 %v849
        %1064 = vmatpush.msra.mxu0 %v847
        %1065 = vmatpush.msra.mxu0 %v845
        %1066 = vmatpush.msra.mxu0 %v843
        %1067 = vmatpush.msra.mxu0 %v841
        %1068 = vmatpush.msra.mxu0 %v839
        %1069 = vmatpush.msra.mxu0 %v837
        %1070 = vmatpush.msra.mxu0 %v835
        %1071 = vmatmul.f32.gmra.mxu0 1.0
        %v1072 = vpop.f32.mrf.mxu0
        %v1073 = vadd.f32 %v1053, %v1072
        %1074 = vdwg.mxu0
        %1075 = vmatpush.msra.mxu0 %v897
        %1076 = vmatpush.msra.mxu0 %v895
        %1077 = vmatpush.msra.mxu0 %v893
        %1078 = vmatpush.msra.mxu0 %v891
        %1079 = vmatpush.msra.mxu0 %v889
        %1080 = vmatpush.msra.mxu0 %v887
        %1081 = vmatpush.msra.mxu0 %v885
        %1082 = vmatpush.msra.mxu0 %v883
        %1083 = vmatpush.msra.mxu0 %v881
        %1084 = vmatpush.msra.mxu0 %v879
        %1085 = vmatpush.msra.mxu0 %v877
        %1086 = vmatpush.msra.mxu0 %v875
        %1087 = vmatpush.msra.mxu0 %v873
        %1088 = vmatpush.msra.mxu0 %v871
        %1089 = vmatpush.msra.mxu0 %v869
        %1090 = vmatpush.msra.mxu0 %v867
        %1091 = vmatmul.f32.gmra.mxu0 1.0
        %v1092 = vpop.f32.mrf.mxu0
        %v1093 = vadd.f32 %v1073, %v1092
        %1094 = vdwg.mxu0
        %1095 = vmatpush.msra.mxu0 %v929
        %1096 = vmatpush.msra.mxu0 %v927
        %1097 = vmatpush.msra.mxu0 %v925
        %1098 = vmatpush.msra.mxu0 %v923
        %1099 = vmatpush.msra.mxu0 %v921
        %1100 = vmatpush.msra.mxu0 %v919
        %1101 = vmatpush.msra.mxu0 %v917
        %1102 = vmatpush.msra.mxu0 %v915
        %1103 = vmatpush.msra.mxu0 %v913
        %1104 = vmatpush.msra.mxu0 %v911
        %1105 = vmatpush.msra.mxu0 %v909
        %1106 = vmatpush.msra.mxu0 %v907
        %1107 = vmatpush.msra.mxu0 %v905
        %1108 = vmatpush.msra.mxu0 %v903
        %1109 = vmatpush.msra.mxu0 %v901
        %1110 = vmatpush.msra.mxu0 %v899
        %1111 = vmatmul.f32.gmra.mxu0 1.0
        %v1112 = vpop.f32.mrf.mxu0
        %v1113 = vadd.f32 %v1093, %v1112
        %1114 = vdwg.mxu0
        %1115 = vmatpush.msra.mxu0 %v961
        %1116 = vmatpush.msra.mxu0 %v959
        %1117 = vmatpush.msra.mxu0 %v957
        %1118 = vmatpush.msra.mxu0 %v955
        %1119 = vmatpush.msra.mxu0 %v953
        %1120 = vmatpush.msra.mxu0 %v951
        %1121 = vmatpush.msra.mxu0 %v949
        %1122 = vmatpush.msra.mxu0 %v947
        %1123 = vmatpush.msra.mxu0 %v945
        %1124 = vmatpush.msra.mxu0 %v943
        %1125 = vmatpush.msra.mxu0 %v941
        %1126 = vmatpush.msra.mxu0 %v939
        %1127 = vmatpush.msra.mxu0 %v937
        %1128 = vmatpush.msra.mxu0 %v935
        %1129 = vmatpush.msra.mxu0 %v933
        %1130 = vmatpush.msra.mxu0 %v931
        %1131 = vmatmul.f32.gmra.mxu0 1.0
        %v1132 = vpop.f32.mrf.mxu0
        %v1133 = vadd.f32 %v1113, %v1132
        %1134 = vdwg.mxu0
        %1135 = vmatpush.msra.mxu0 %v993
        %1136 = vmatpush.msra.mxu0 %v991
        %1137 = vmatpush.msra.mxu0 %v989
        %1138 = vmatpush.msra.mxu0 %v987
        %1139 = vmatpush.msra.mxu0 %v985
        %1140 = vmatpush.msra.mxu0 %v983
        %1141 = vmatpush.msra.mxu0 %v981
        %1142 = vmatpush.msra.mxu0 %v979
        %1143 = vmatpush.msra.mxu0 %v977
        %1144 = vmatpush.msra.mxu0 %v975
        %1145 = vmatpush.msra.mxu0 %v973
        %1146 = vmatpush.msra.mxu0 %v971
        %1147 = vmatpush.msra.mxu0 %v969
        %1148 = vmatpush.msra.mxu0 %v967
        %1149 = vmatpush.msra.mxu0 %v965
        %1150 = vmatpush.msra.mxu0 %v963
        %1151 = vmatmul.f32.gmra.mxu0 1.0
        %v1152 = vpop.f32.mrf.mxu0
        %v1153 = vadd.f32 %v1133, %v1152
        %1154 = vdwg.mxu0
        %1155 = vmatpush.msra.mxu0 %v770
        %1156 = vmatpush.msra.mxu0 %v768
        %1157 = vmatpush.msra.mxu0 %v766
        %1158 = vmatpush.msra.mxu0 %v764
        %1159 = vmatpush.msra.mxu0 %v762
        %1160 = vmatpush.msra.mxu0 %v760
        %1161 = vmatpush.msra.mxu0 %v758
        %1162 = vmatpush.msra.mxu0 %v756
        %1163 = vmatpush.msra.mxu0 %v754
        %1164 = vmatpush.msra.mxu0 %v752
        %1165 = vmatpush.msra.mxu0 %v750
        %1166 = vmatpush.msra.mxu0 %v748
        %1167 = vmatpush.msra.mxu0 %v746
        %1168 = vmatpush.msra.mxu0 %v744
        %1169 = vmatpush.msra.mxu0 %v742
        %1170 = vmatpush.msra.mxu0 %v740
        %1171 = vmatmul.f32.gmra.mxu0 1.0
        %v1172 = vpop.f32.mrf.mxu0
        %v1173 = vadd.f32 0.0, %v1172
        %1174 = vdwg.mxu0
        %1175 = vmatpush.msra.mxu0 %v802
        %1176 = vmatpush.msra.mxu0 %v800
        %1177 = vmatpush.msra.mxu0 %v798
        %1178 = vmatpush.msra.mxu0 %v796
        %1179 = vmatpush.msra.mxu0 %v794
        %1180 = vmatpush.msra.mxu0 %v792
        %1181 = vmatpush.msra.mxu0 %v790
        %1182 = vmatpush.msra.mxu0 %v788
        %1183 = vmatpush.msra.mxu0 %v786
        %1184 = vmatpush.msra.mxu0 %v784
        %1185 = vmatpush.msra.mxu0 %v782
        %1186 = vmatpush.msra.mxu0 %v780
        %1187 = vmatpush.msra.mxu0 %v778
        %1188 = vmatpush.msra.mxu0 %v776
        %1189 = vmatpush.msra.mxu0 %v774
        %1190 = vmatpush.msra.mxu0 %v772
        %1191 = vmatmul.f32.gmra.mxu0 1.0
        %v1192 = vpop.f32.mrf.mxu0
        %v1193 = vadd.f32 %v1173, %v1192
        %1194 = vdwg.mxu0
        %1195 = vmatpush.msra.mxu0 %v834
        %1196 = vmatpush.msra.mxu0 %v832
        %1197 = vmatpush.msra.mxu0 %v830
        %1198 = vmatpush.msra.mxu0 %v828
        %1199 = vmatpush.msra.mxu0 %v826
        %1200 = vmatpush.msra.mxu0 %v824
        %1201 = vmatpush.msra.mxu0 %v822
        %1202 = vmatpush.msra.mxu0 %v820
        %1203 = vmatpush.msra.mxu0 %v818
        %1204 = vmatpush.msra.mxu0 %v816
        %1205 = vmatpush.msra.mxu0 %v814
        %1206 = vmatpush.msra.mxu0 %v812
        %1207 = vmatpush.msra.mxu0 %v810
        %1208 = vmatpush.msra.mxu0 %v808
        %1209 = vmatpush.msra.mxu0 %v806
        %1210 = vmatpush.msra.mxu0 %v804
        %1211 = vmatmul.f32.gmra.mxu0 1.0
        %v1212 = vpop.f32.mrf.mxu0
        %v1213 = vadd.f32 %v1193, %v1212
        %1214 = vdwg.mxu0
        %1215 = vmatpush.msra.mxu0 %v866
        %1216 = vmatpush.msra.mxu0 %v864
        %1217 = vmatpush.msra.mxu0 %v862
        %1218 = vmatpush.msra.mxu0 %v860
        %1219 = vmatpush.msra.mxu0 %v858
        %1220 = vmatpush.msra.mxu0 %v856
        %1221 = vmatpush.msra.mxu0 %v854
        %1222 = vmatpush.msra.mxu0 %v852
        %1223 = vmatpush.msra.mxu0 %v850
        %1224 = vmatpush.msra.mxu0 %v848
        %1225 = vmatpush.msra.mxu0 %v846
        %1226 = vmatpush.msra.mxu0 %v844
        %1227 = vmatpush.msra.mxu0 %v842
        %1228 = vmatpush.msra.mxu0 %v840
        %1229 = vmatpush.msra.mxu0 %v838
        %1230 = vmatpush.msra.mxu0 %v836
        %1231 = vmatmul.f32.gmra.mxu0 1.0
        %v1232 = vpop.f32.mrf.mxu0
        %v1233 = vadd.f32 %v1213, %v1232
        %1234 = vdwg.mxu0
        %1235 = vmatpush.msra.mxu0 %v898
        %1236 = vmatpush.msra.mxu0 %v896
        %1237 = vmatpush.msra.mxu0 %v894
        %1238 = vmatpush.msra.mxu0 %v892
        %1239 = vmatpush.msra.mxu0 %v890
        %1240 = vmatpush.msra.mxu0 %v888
        %1241 = vmatpush.msra.mxu0 %v886
        %1242 = vmatpush.msra.mxu0 %v884
        %1243 = vmatpush.msra.mxu0 %v882
        %1244 = vmatpush.msra.mxu0 %v880
        %1245 = vmatpush.msra.mxu0 %v878
        %1246 = vmatpush.msra.mxu0 %v876
        %1247 = vmatpush.msra.mxu0 %v874
        %1248 = vmatpush.msra.mxu0 %v872
        %1249 = vmatpush.msra.mxu0 %v870
        %1250 = vmatpush.msra.mxu0 %v868
        %1251 = vmatmul.f32.gmra.mxu0 1.0
        %v1252 = vpop.f32.mrf.mxu0
        %v1253 = vadd.f32 %v1233, %v1252
        %1254 = vdwg.mxu0
        %1255 = vmatpush.msra.mxu0 %v930
        %1256 = vmatpush.msra.mxu0 %v928
        %1257 = vmatpush.msra.mxu0 %v926
        %1258 = vmatpush.msra.mxu0 %v924
        %1259 = vmatpush.msra.mxu0 %v922
        %1260 = vmatpush.msra.mxu0 %v920
        %1261 = vmatpush.msra.mxu0 %v918
        %1262 = vmatpush.msra.mxu0 %v916
        %1263 = vmatpush.msra.mxu0 %v914
        %1264 = vmatpush.msra.mxu0 %v912
        %1265 = vmatpush.msra.mxu0 %v910
        %1266 = vmatpush.msra.mxu0 %v908
        %1267 = vmatpush.msra.mxu0 %v906
        %1268 = vmatpush.msra.mxu0 %v904
        %1269 = vmatpush.msra.mxu0 %v902
        %1270 = vmatpush.msra.mxu0 %v900
        %1271 = vmatmul.f32.gmra.mxu0 1.0
        %v1272 = vpop.f32.mrf.mxu0
        %v1273 = vadd.f32 %v1253, %v1272
        %1274 = vdwg.mxu0
        %1275 = vmatpush.msra.mxu0 %v962
        %1276 = vmatpush.msra.mxu0 %v960
        %1277 = vmatpush.msra.mxu0 %v958
        %1278 = vmatpush.msra.mxu0 %v956
        %1279 = vmatpush.msra.mxu0 %v954
        %1280 = vmatpush.msra.mxu0 %v952
        %1281 = vmatpush.msra.mxu0 %v950
        %1282 = vmatpush.msra.mxu0 %v948
        %1283 = vmatpush.msra.mxu0 %v946
        %1284 = vmatpush.msra.mxu0 %v944
        %1285 = vmatpush.msra.mxu0 %v942
        %1286 = vmatpush.msra.mxu0 %v940
        %1287 = vmatpush.msra.mxu0 %v938
        %1288 = vmatpush.msra.mxu0 %v936
        %1289 = vmatpush.msra.mxu0 %v934
        %1290 = vmatpush.msra.mxu0 %v932
        %1291 = vmatmul.f32.gmra.mxu0 1.0
        %v1292 = vpop.f32.mrf.mxu0
        %v1293 = vadd.f32 %v1273, %v1292
        %1294 = vdwg.mxu0
        %1295 = vmatpush.msra.mxu0 %v994
        %1296 = vmatpush.msra.mxu0 %v992
        %1297 = vmatpush.msra.mxu0 %v990
        %1298 = vmatpush.msra.mxu0 %v988
        %1299 = vmatpush.msra.mxu0 %v986
        %1300 = vmatpush.msra.mxu0 %v984
        %1301 = vmatpush.msra.mxu0 %v982
        %1302 = vmatpush.msra.mxu0 %v980
        %1303 = vmatpush.msra.mxu0 %v978
        %1304 = vmatpush.msra.mxu0 %v976
        %1305 = vmatpush.msra.mxu0 %v974
        %1306 = vmatpush.msra.mxu0 %v972
        %1307 = vmatpush.msra.mxu0 %v970
        %1308 = vmatpush.msra.mxu0 %v968
        %1309 = vmatpush.msra.mxu0 %v966
        %1310 = vmatpush.msra.mxu0 %v964
        %1311 = vmatmul.f32.gmra.mxu0 1.0
        %v1312 = vpop.f32.mrf.mxu0
        %v1313 = vadd.f32 %v1293, %v1312
        %1314 = vdwg.mxu0
        %v1315 = vld [vmem:[#allocation5] sm:$0x3]
        %v1318 = vrot.slane %v737, 7
        %vm1319 = vcmask 1040384
        %v1320 = vsel %vm1319, %v577, %v1318
        %v1322 = vadd.f32 %v1315, %v1320
        %v1323 = vlaneseq
        %vm1324 = vcmp.ge.s32.totalorder %v1323, 0
        %vm1325 = vcmp.lt.s32.totalorder %v1323, 256
        %vm1326 = vmand %vm1324, %vm1325
        %1327 = vst.msk [vmem:[#allocation5] sm:$0x3] %vm1326, %v1322
        %v1328 = vld [vmem:[#allocation6] sm:$0x3]
        %v1331 = vrot.slane %v1313, 7
        %v1332 = vsel %vm1319, %v1153, %v1331
        %v1334 = vadd.f32 %v1328, %v1332
        %1335 = vst.msk [vmem:[#allocation6] sm:$0x3] %vm1326, %v1334
        // Predicated region
        $region33: #{tpu_custom_call.1} parent=23 // pred_check
          %p1336 = pneg %p58
        $region34: #{tpu_custom_call.1} parent=23 // pred_check_branch
          %1338 = sbr.rel (%p1336) target = $region36
        $region35: #{tpu_custom_call.1} parent=23 // pred_region
          %1340 = vsyncadd [#allocation4], 0
          %s1342 = sshll.u32 [#allocation5], 4
          %s1343 = int_to_ptr.vmem [resolvable:$true] %s1342
          %s1344 = sshll.u32 %s1, 4
          %s1345 = int_to_ptr.hbm [resolvable:$true] %s1344
          %1347 = dma.vmem_to_hbm [thread:$0]  %s1343, 32, %s1345, [#allocation4]
        $region36: #{tpu_custom_call.1} parent=23 // pred_fallthru
          _
        // Predicated region
        $region37: #{tpu_custom_call.1} parent=23 // pred_check
          %p1348 = pneg %p79
        $region38: #{tpu_custom_call.1} parent=23 // pred_check_branch
          %1350 = sbr.rel (%p1348) target = $region40
        $region39: #{tpu_custom_call.1} parent=23 // pred_region
          %1352 = vsyncadd [#allocation7], 0
          %s1354 = sshll.u32 [#allocation6], 4
          %s1355 = int_to_ptr.vmem [resolvable:$true] %s1354
          %s1356 = sshll.u32 %s2, 4
          %s1357 = int_to_ptr.hbm [resolvable:$true] %s1356
          %1359 = dma.vmem_to_hbm [thread:$0]  %s1355, 32, %s1357, [#allocation7]
        $region40: #{tpu_custom_call.1} parent=23 // pred_fallthru
          _
        // Predicated region
        $region41: #{tpu_custom_call.1} parent=23 // pred_check
          %p1360 = pneg %p58
        $region42: #{tpu_custom_call.1} parent=23 // pred_check_branch
          %1362 = sbr.rel (%p1360) target = $region44
        $region43: #{tpu_custom_call.1} parent=23 // pred_region
          %1364 = dma.done [#allocation4], 32
        $region44: #{tpu_custom_call.1} parent=23 // pred_fallthru
          _
        // Predicated region
        $region45: #{tpu_custom_call.1} parent=23 // pred_check
          %p1365 = pneg %p79
        $region46: #{tpu_custom_call.1} parent=23 // pred_check_branch
          %1367 = sbr.rel (%p1365) target = $region48
        $region47: #{tpu_custom_call.1} parent=23 // pred_region
          %1369 = dma.done [#allocation7], 32
        $region48: #{tpu_custom_call.1} parent=23 // pred_fallthru
          _
      $region24: #{tpu_custom_call.1} parent=5 // pred_fallthru
        _
      %p1370 = scmp.le.s32.totalorder 2, %s14
      // Predicated region
      $region49: #{tpu_custom_call.1} parent=5 // pred_check
        %p1371 = pneg %p1370
      $region50: #{tpu_custom_call.1} parent=5 // pred_check_branch
        %1373 = sbr.rel (%p1371) target = $region52
      $region51: #{tpu_custom_call.1} parent=5 // pred_region
        %s1374 = ssub.s32 %s14, 2
      $region52: #{tpu_custom_call.1} parent=5 // pred_fallthru
        _
    $region6: #{tpu_custom_call.1} parent=1 // loop_footer
      %s18 = sadd.s32 1, %s14
    $region7: #{tpu_custom_call.1} parent=1 // loop_footer_branch
      %13 = sbr.rel target = $region3
    $region8: #{tpu_custom_call.1} parent=1 // loop_exit
      _
    %1375 = vsyncpa [#allocation3], 1
    %s1376 = scalar_lea.sflag [#allocation3], 1
    %1377 = vsyncpa %s1376, 1
    %1378 = vsyncpa [#allocation4], 1
    %s1379 = scalar_lea.sflag [#allocation4], 1
    %1380 = vsyncpa %s1379, 1
    %1381 = vsyncpa [#allocation7], 1

</llo_original>
